<compile_context>
chip_gen: v6e
topology: v6e:2x2x1
jax: 0.10.0
libtpu: 0.0.40
codegen_flags: <defaults>
</compile_context>

<pallas_src>
import jax
import jax.numpy as jnp
from jax.experimental import pallas as pl
from jax.experimental.pallas import tpu as pltpu

# label-smoothing scale from the reference module: 0.9 + 0.1 * 20 / 21
_SMOOTH_SCALE = 0.9 + 0.1 * 20.0 / 21.0


def _make_loss_kernel(n_total, c, tile_n, needs_mask):
    # Fold label-smoothing scale and the mean divisor into one *Python float*
    # compile-time constant (a jnp scalar here would become a captured constant).
    final_scale = float(_SMOOTH_SCALE) / float(n_total * c)

    def kernel(out_ref, tgt_ref, w_ref, loss_ref, acc_ref):
        i = pl.program_id(0)

        @pl.when(i == 0)
        def _init():
            acc_ref[...] = jnp.zeros_like(acc_ref)

        x = out_ref[...]            # (tile_n, c) f32 logits
        t = tgt_ref[...]            # (tile_n, 1) i32 target class indices
        w = w_ref[...]              # (1, c)      f32 per-class weights

        # Stable softmax pieces (these two lane reductions are required anyway).
        m = jnp.max(x, axis=1, keepdims=True)
        denom = jnp.sum(jnp.exp(x - m), axis=1, keepdims=True)
        # -log(softmax(x)) = m + log(denom) - x
        neg_log_softmax = (m + jnp.log(denom)) - x

        # Fused "gather at target": only the target-class entry of each row is kept.
        class_iota = jax.lax.broadcasted_iota(jnp.int32, (tile_n, c), 1)
        onehot = class_iota == t
        contrib = jnp.where(onehot, w * neg_log_softmax, 0.0)

        if needs_mask:
            # Zero out padded rows of the final partial tile (values there are
            # unspecified); keeps the mean divisor at exactly N*C.
            row_iota = jax.lax.broadcasted_iota(jnp.int32, (tile_n, 1), 0)
            valid = (i * tile_n + row_iota) < n_total
            contrib = jnp.where(valid, contrib, 0.0)

        # Elementwise accumulate; the cross-lane reduction is deferred to the epilogue.
        acc_ref[...] += contrib

        @pl.when(i == pl.num_programs(0) - 1)
        def _finalize():
            loss_ref[0, 0] = jnp.sum(acc_ref[...]) * final_scale

    return kernel


def custom_loss(outputs, targets, weight, *, tile_n=None):
    """outputs: (N, C) f32 logits, targets: (N,) int, weight: (C,) f32 -> scalar f32."""
    n, c = outputs.shape
    if tile_n is None:
        # Large enough to amortize per-step overhead, small enough that the
        # double-buffered (tile_n, C) f32 blocks fit comfortably in VMEM
        # (sized conservatively so it also holds on v7x's 64 MiB VMEM).
        tile_n = n if n <= 512 else 512
    if tile_n != n and tile_n % 8 != 0:
        raise ValueError("tile_n must equal N or be a multiple of 8")

    grid = (pl.cdiv(n, tile_n),)
    needs_mask = (n % tile_n) != 0

    targets2d = targets.astype(jnp.int32).reshape(n, 1)
    weight2d = weight.astype(jnp.float32).reshape(1, c)

    kernel = _make_loss_kernel(n, c, tile_n, needs_mask)

    out = pl.pallas_call(
        kernel,
        out_shape=jax.ShapeDtypeStruct((1, 1), jnp.float32),
        grid=grid,
        in_specs=[
            pl.BlockSpec((tile_n, c), lambda i: (i, 0)),   # logits tile
            pl.BlockSpec((tile_n, 1), lambda i: (i, 0)),   # targets tile
            pl.BlockSpec((1, c), lambda i: (0, 0)),        # weights (VMEM-resident)
        ],
        out_specs=pl.BlockSpec(memory_space=pltpu.MemorySpace.SMEM),  # scalar result
        scratch_shapes=[pltpu.VMEM((tile_n, c), jnp.float32)],
        compiler_params=pltpu.CompilerParams(
            dimension_semantics=("arbitrary",),
        ),
    )(outputs.astype(jnp.float32), targets2d, weight2d)
    return out[0, 0]


def custom_loss_reference(outputs, targets, weight):
    """Pure-JAX reference mirroring the PyTorch forward."""
    n, c = outputs.shape
    onehot = jax.nn.one_hot(targets, c, dtype=jnp.float32)
    onehot = onehot * 0.9 + onehot * 0.1 * 20.0 / 21.0
    probs = jax.nn.softmax(outputs, axis=1)
    loss = -onehot * jnp.log(probs)
    w = jnp.broadcast_to(weight.reshape(1, c), (n, c))
    return jnp.mean(w * loss)


if __name__ == "__main__":
    key = jax.random.PRNGKey(0)

    # Case 1: multi-tile grid (N divisible by TILE_N).
    N1, C1, TILE1 = 16, 16, 8
    k1, k2, k3, key = jax.random.split(key, 4)
    outs1 = jax.random.normal(k1, (N1, C1), dtype=jnp.float32)
    tgts1 = jax.random.randint(k2, (N1,), 0, C1, dtype=jnp.int32)
    w1 = jax.random.uniform(k3, (C1,), dtype=jnp.float32, minval=0.5, maxval=1.5)

    loss1 = custom_loss(outs1, tgts1, w1, tile_n=TILE1)
    jax.block_until_ready(loss1)
    ref1 = custom_loss_reference(outs1, tgts1, w1)
    assert jnp.allclose(loss1, ref1, rtol=1e-5, atol=1e-6), (loss1, ref1)

    # Case 2: ragged last tile (N not divisible by TILE_N) exercises the row mask.
    N2, C2, TILE2 = 12, 16, 8
    k4, k5, k6, key = jax.random.split(key, 4)
    outs2 = jax.random.normal(k4, (N2, C2), dtype=jnp.float32)
    tgts2 = jax.random.randint(k5, (N2,), 0, C2, dtype=jnp.int32)
    w2 = jax.random.uniform(k6, (C2,), dtype=jnp.float32, minval=0.5, maxval=1.5)

    loss2 = custom_loss(outs2, tgts2, w2, tile_n=TILE2)
    jax.block_until_ready(loss2)
    ref2 = custom_loss_reference(outs2, tgts2, w2)
    assert jnp.allclose(loss2, ref2, rtol=1e-5, atol=1e-6), (loss2, ref2)

    # Case 3: single-tile default path.
    N3, C3 = 8, 16
    k7, k8, k9, key = jax.random.split(key, 4)
    outs3 = jax.random.normal(k7, (N3, C3), dtype=jnp.float32)
    tgts3 = jax.random.randint(k8, (N3,), 0, C3, dtype=jnp.int32)
    w3 = jax.random.uniform(k9, (C3,), dtype=jnp.float32, minval=0.5, maxval=1.5)

    loss3 = custom_loss(outs3, tgts3, w3)
    jax.block_until_ready(loss3)
    ref3 = custom_loss_reference(outs3, tgts3, w3)
    assert jnp.allclose(loss3, ref3, rtol=1e-5, atol=1e-6), (loss3, ref3)

    print("KERNEL_OK")
</pallas_src>

<mosaic_0001>
module attributes {stable_mosaic.version = 11 : i64} {
  func.func @kernel(%arg0: i32, %arg1: memref<8x16xf32, #tpu.memory_space<vmem>>, %arg2: memref<8x1xi32, #tpu.memory_space<vmem>>, %arg3: memref<1x16xf32, #tpu.memory_space<vmem>>, %arg4: memref<1x1xf32, #tpu.memory_space<smem>>, %arg5: memref<8x16xf32, #tpu.memory_space<vmem>>) attributes {dimension_semantics = [#tpu.dimension_semantics<arbitrary>], iteration_bounds = array<i64: 2>, scalar_prefetch = 0 : i64, scratch_operands = 1 : i64, tpu.core_type = #tpu.core_type<tc>, window_params = [{transform_indices = @transform_0, window_bounds = array<i64: 8, 16>}, {transform_indices = @transform_1, window_bounds = array<i64: 8, 1>}, {pipeline_mode = #tpu.pipeline_mode<synchronous>, transform_indices = @transform_2, window_bounds = array<i64: 1, 16>}, {transform_indices = @transform_3, window_bounds = array<i64: 1, 1>}]} {
    %c0_i32 = arith.constant 0 : i32
    %0 = arith.cmpi eq, %arg0, %c0_i32 : i32
    %1 = arith.extui %0 : i1 to i32
    %c0_i32_0 = arith.constant 0 : i32
    %2 = arith.cmpi ne, %1, %c0_i32_0 : i32
    scf.if %2 {
      %cst_13 = arith.constant 0.000000e+00 : f32
      %30 = vector.broadcast %cst_13 : f32 to vector<8x16xf32>
      %c0_14 = arith.constant 0 : index
      %c0_15 = arith.constant 0 : index
      %31 = vector.load %arg5[%c0_14, %c0_15] : memref<8x16xf32, #tpu.memory_space<vmem>>, vector<8x16xf32>
      tpu.vector_store %arg5[%c0_14, %c0_15], %30 {strides = array<i32>} : memref<8x16xf32, #tpu.memory_space<vmem>>, vector<8x16xf32>,
    } else {
    }
    %c0 = arith.constant 0 : index
    %c0_1 = arith.constant 0 : index
    %3 = vector.load %arg1[%c0, %c0_1] : memref<8x16xf32, #tpu.memory_space<vmem>>, vector<8x16xf32>
    %c0_2 = arith.constant 0 : index
    %c0_3 = arith.constant 0 : index
    %4 = vector.load %arg2[%c0_2, %c0_3] : memref<8x1xi32, #tpu.memory_space<vmem>>, vector<8x1xi32>
    %c0_4 = arith.constant 0 : index
    %c0_5 = arith.constant 0 : index
    %5 = vector.load %arg3[%c0_4, %c0_5] : memref<1x16xf32, #tpu.memory_space<vmem>>, vector<1x16xf32>
    %cst = arith.constant dense<0xFF800000> : vector<8xf32>
    %6 = vector.multi_reduction <maximumf>, %3, %cst [1] : vector<8x16xf32> to vector<8xf32>
    %7 = vector.shape_cast %6 : vector<8xf32> to vector<8x1xf32>
    %8 = vector.broadcast %7 : vector<8x1xf32> to vector<8x16xf32>
    %9 = arith.subf %3, %8 : vector<8x16xf32>
    %10 = math.exp %9 : vector<8x16xf32>
    %cst_6 = arith.constant dense<0.000000e+00> : vector<8xf32>
    %11 = vector.multi_reduction <add>, %10, %cst_6 [1] : vector<8x16xf32> to vector<8xf32>
    %12 = vector.shape_cast %11 : vector<8xf32> to vector<8x1xf32>
    %13 = math.log %12 : vector<8x1xf32>
    %14 = arith.addf %7, %13 : vector<8x1xf32>
    %15 = vector.broadcast %14 : vector<8x1xf32> to vector<8x16xf32>
    %16 = arith.subf %15, %3 : vector<8x16xf32>
    %17 = tpu.iota {dimensions = array<i32: 1>} : vector<8x16xi32>
    %18 = vector.broadcast %4 : vector<8x1xi32> to vector<8x16xi32>
    %19 = arith.cmpi eq, %17, %18 : vector<8x16xi32>
    %20 = vector.broadcast %5 : vector<1x16xf32> to vector<8x16xf32>
    %21 = arith.mulf %20, %16 : vector<8x16xf32>
    %cst_7 = arith.constant 0.000000e+00 : f32
    %22 = vector.broadcast %cst_7 : f32 to vector<8x16xf32>
    %23 = arith.select %19, %21, %22 : vector<8x16xi1>, vector<8x16xf32>
    %c0_8 = arith.constant 0 : index
    %c0_9 = arith.constant 0 : index
    %24 = vector.load %arg5[%c0_8, %c0_9] : memref<8x16xf32, #tpu.memory_space<vmem>>, vector<8x16xf32>
    %25 = arith.addf %24, %23 : vector<8x16xf32>
    %c0_10 = arith.constant 0 : index
    %c0_11 = arith.constant 0 : index
    %26 = vector.load %arg5[%c0_10, %c0_11] : memref<8x16xf32, #tpu.memory_space<vmem>>, vector<8x16xf32>
    tpu.vector_store %arg5[%c0_10, %c0_11], %25 {strides = array<i32>} : memref<8x16xf32, #tpu.memory_space<vmem>>, vector<8x16xf32>,
    %c1_i32 = arith.constant 1 : i32
    %27 = arith.cmpi eq, %arg0, %c1_i32 : i32
    %28 = arith.extui %27 : i1 to i32
    %c0_i32_12 = arith.constant 0 : i32
    %29 = arith.cmpi ne, %28, %c0_i32_12 : i32
    scf.if %29 {
      %c0_13 = arith.constant 0 : index
      %c0_14 = arith.constant 0 : index
      %30 = vector.load %arg5[%c0_13, %c0_14] : memref<8x16xf32, #tpu.memory_space<vmem>>, vector<8x16xf32>
      %31 = vector.shape_cast %30 : vector<8x16xf32> to vector<1x8x16xf32>
      %cst_15 = arith.constant dense<0.000000e+00> : vector<1xf32>
      %32 = vector.multi_reduction <add>, %31, %cst_15 [1, 2] : vector<1x8x16xf32> to vector<1xf32>
      %33 = vector.shape_cast %32 : vector<1xf32> to vector<1x1x1xf32>
      %34 = vector.extract %33[0, 0, 0] : f32 from vector<1x1x1xf32>
      %cst_16 = arith.constant 0.00388764869 : f32
      %35 = arith.mulf %34, %cst_16 : f32
      %c0_17 = arith.constant 0 : index
      %c0_18 = arith.constant 0 : index
      %36 = memref.load %arg4[%c0_17, %c0_18] : memref<1x1xf32, #tpu.memory_space<smem>>
      memref.store %35, %arg4[%c0_17, %c0_18] : memref<1x1xf32, #tpu.memory_space<smem>>
    } else {
    }
    return
  }
  func.func @transform_0(%arg0: i32) -> (i32, i32) {
    %c0_i32 = arith.constant 0 : i32
    %c0_i32_0 = arith.constant 0 : i32
    return %arg0, %c0_i32 : i32, i32
  }
  func.func @transform_1(%arg0: i32) -> (i32, i32) {
    %c0_i32 = arith.constant 0 : i32
    %c0_i32_0 = arith.constant 0 : i32
    return %arg0, %c0_i32 : i32, i32
  }
  func.func @transform_2(%arg0: i32) -> (i32, i32) {
    %c0_i32 = arith.constant 0 : i32
    %c0_i32_0 = arith.constant 0 : i32
    %c0_i32_1 = arith.constant 0 : i32
    return %c0_i32, %c0_i32_0 : i32, i32
  }
  func.func @transform_3(%arg0: i32) -> (i32, i32) {
    %c0_i32 = arith.constant 0 : i32
    %c0_i32_0 = arith.constant 0 : i32
    %c0_i32_1 = arith.constant 0 : i32
    return %c0_i32, %c0_i32_0 : i32, i32
  }
}

</mosaic_0001>

<llo_original>
// kernel: tpu_custom_call.1
$region0: #{tpu_custom_call.1}
  #allocation0 [shape = 'u32[]', space=smem, size = 0x4, offset = 0x4, fixed_abs, tag = 'smem constant byte address 0x4 - core index']
  #allocation1 [shape = 'u32[144,128]{1,0:T(1,128)}', space=vmem, size = 0x12000, scoped, tag = 'internal scratch']
  #allocation2 [shape = 'f32[8,16]{1,0:T(8,128)}', space=vmem, size = 0x1000, scoped, tag = 'scratch operand']
  %s0 = inlined_call_operand.vmem [shape: f32[16,16], index: 0, kind: input, shape index: {}]
  %s1 = inlined_call_operand.vmem [shape: s32[16,1], index: 1, kind: input, shape index: {}]
  %s2 = inlined_call_operand.vmem [shape: f32[1,16], index: 2, kind: input, shape index: {}]
  %s3 = inlined_call_operand.hbm [shape: f32[1,1], index: 3, kind: output, shape index: {}]
  %s4 = sld [smem:[#allocation0]]
  $region53: #{tpu_custom_call.1} parent=0
    _
  %s6 = ssub.s32 1, %s4
  %s7 = scalar_select 0, %s6, %s4
  $region1: #{tpu_custom_call.1} parent=0
    #allocation3 [shape = 'u8[512]{0}', space=smem, size = 0x200, scoped, tag = 'output window, operand 0, single buffered']
    #allocation4 [shape = 's32[2]{0}', space=sflag, size = 0x8, scoped, tag = 'scoped memory for tpu_custom_call.1']
    %8 = vsyncpa [#allocation4], 0
    loop: start=0, step=1, limit=4
    $region2: #{tpu_custom_call.1} parent=1 // loop_pre_header
      _
    $region3: #{tpu_custom_call.1} parent=1 // loop_header
      %s10 = sphi 0, %s14
      %p11 = scmp.ge.s32.totalorder %s10, 4
      %s20 = sphi 0, %s22
      %s23 = sphi 0, %s20
      %s24 = sphi 0, %s23
      %s40 = sphi 0, %s24
      %s46 = sphi 0, %s48
      %s49 = sphi 0, %s46
      %s50 = sphi 0, %s49
      %s66 = sphi 0, %s50
      %s70 = sphi 0, %s70
      %s72 = sphi 0, %s70
      %s73 = sphi 0, %s72
      %s87 = sphi 0, %s73
      %s91 = sphi 0, %s91
      %s93 = sphi 0, %s91
      %s94 = sphi 0, %s93
      %s108 = sphi 0, %s94
    $region4: #{tpu_custom_call.1} parent=1 // loop_header_branch
      %13 = sbr.rel (%p11) target = $region8
    $region5: #{tpu_custom_call.1} parent=1 // loop_body
      %s15 = ssub.s32 %s10, 1
      %s16 = ssub.s32 %s10, 2
      %s17 = sadd.s32 %s10, 1
      %s18 = ssub.s32 %s10, %s17
      %p19 = scmp.eq.s32.totalorder %s18, 0
      %s21 = sadd.s32 %s20, 1
      %s22 = scalar_select %p19, %s20, %s21
      %p25 = pneg %p19
      %p26 = scmp.eq.s32.totalorder %s10, 1
      %p27 = por %p25, %p26
      %p28 = scmp.ne.s32.totalorder %s20, %s23
      %p29 = scmp.eq.s32.totalorder %s10, 0
      %p30 = por %p28, %p29
      %p31 = scmp.ne.s32.totalorder %s20, %s23
      %p32 = scmp.eq.s32.totalorder %s15, 1
      %p33 = por %p31, %p32
      %p34 = scmp.ne.s32.totalorder %s23, %s24
      %p35 = scmp.eq.s32.totalorder %s15, 0
      %p36 = por %p34, %p35
      %p37 = scmp.ne.s32.totalorder %s23, %s24
      %p38 = scmp.eq.s32.totalorder %s16, 1
      %p39 = por %p37, %p38
      %p41 = scmp.ne.s32.totalorder %s24, %s40
      %p42 = scmp.eq.s32.totalorder %s16, 0
      %p43 = por %p41, %p42
      %s44 = ssub.s32 %s10, %s17
      %p45 = scmp.eq.s32.totalorder %s44, 0
      %s47 = sadd.s32 %s46, 1
      %s48 = scalar_select %p45, %s46, %s47
      %p51 = pneg %p45
      %p52 = scmp.eq.s32.totalorder %s10, 1
      %p53 = por %p51, %p52
      %p54 = scmp.ne.s32.totalorder %s46, %s49
      %p55 = scmp.eq.s32.totalorder %s10, 0
      %p56 = por %p54, %p55
      %p57 = scmp.ne.s32.totalorder %s46, %s49
      %p58 = scmp.eq.s32.totalorder %s15, 1
      %p59 = por %p57, %p58
      %p60 = scmp.ne.s32.totalorder %s49, %s50
      %p61 = scmp.eq.s32.totalorder %s15, 0
      %p62 = por %p60, %p61
      %p63 = scmp.ne.s32.totalorder %s49, %s50
      %p64 = scmp.eq.s32.totalorder %s16, 1
      %p65 = por %p63, %p64
      %p67 = scmp.ne.s32.totalorder %s50, %s66
      %p68 = scmp.eq.s32.totalorder %s16, 0
      %p69 = por %p67, %p68
      %s71 = sadd.s32 %s70, 1
      %p74 = scmp.eq.s32.totalorder %s10, 1
      %p75 = scmp.ne.s32.totalorder %s70, %s72
      %p76 = scmp.eq.s32.totalorder %s10, 0
      %p77 = por %p75, %p76
      %p78 = scmp.ne.s32.totalorder %s70, %s72
      %p79 = scmp.eq.s32.totalorder %s15, 1
      %p80 = por %p78, %p79
      %p81 = scmp.ne.s32.totalorder %s72, %s73
      %p82 = scmp.eq.s32.totalorder %s15, 0
      %p83 = por %p81, %p82
      %p84 = scmp.ne.s32.totalorder %s72, %s73
      %p85 = scmp.eq.s32.totalorder %s16, 1
      %p86 = por %p84, %p85
      %p88 = scmp.ne.s32.totalorder %s73, %s87
      %p89 = scmp.eq.s32.totalorder %s16, 0
      %p90 = por %p88, %p89
      %s92 = sadd.s32 %s91, 1
      %p95 = scmp.eq.s32.totalorder %s10, 1
      %p96 = scmp.ne.s32.totalorder %s91, %s93
      %p97 = scmp.eq.s32.totalorder %s10, 0
      %p98 = por %p96, %p97
      %p99 = scmp.ne.s32.totalorder %s91, %s93
      %p100 = scmp.eq.s32.totalorder %s15, 1
      %p101 = por %p99, %p100
      %p102 = scmp.ne.s32.totalorder %s93, %s94
      %p103 = scmp.eq.s32.totalorder %s15, 0
      %p104 = por %p102, %p103
      %p105 = scmp.ne.s32.totalorder %s93, %s94
      %p106 = scmp.eq.s32.totalorder %s16, 1
      %p107 = por %p105, %p106
      %p109 = scmp.ne.s32.totalorder %s94, %s108
      %p110 = scmp.eq.s32.totalorder %s16, 0
      %p111 = por %p109, %p110
      %p112 = scmp.le.s32.totalorder 1, %s10
      %p113 = scmp.lt.s32.totalorder %s10, 3
      %p114 = pnand %p112, %p113
      %p115 = pneg %p114
      // Predicated region
      $region9: #{tpu_custom_call.1} parent=5 // pred_check
        _
      $region10: #{tpu_custom_call.1} parent=5 // pred_check_branch
        %117 = sbr.rel (%p114) target = $region12
      $region11: #{tpu_custom_call.1} parent=5 // pred_region
        %s118 = ssub.s32 %s10, 1
        // Predicated region
        $region13: #{tpu_custom_call.1} parent=11 // pred_check
          %p119 = pneg %p83
        $region14: #{tpu_custom_call.1} parent=11 // pred_check_branch
          %121 = sbr.rel (%p119) target = $region16
        $region15: #{tpu_custom_call.1} parent=11 // pred_region
          _
        $region16: #{tpu_custom_call.1} parent=11 // pred_fallthru
          _
      $region12: #{tpu_custom_call.1} parent=5 // pred_fallthru
        _
      %p122 = scmp.lt.s32.totalorder %s10, 2
      // Predicated region
      $region17: #{tpu_custom_call.1} parent=5 // pred_check
        %p123 = pneg %p122
      $region18: #{tpu_custom_call.1} parent=5 // pred_check_branch
        %125 = sbr.rel (%p123) target = $region20
      $region19: #{tpu_custom_call.1} parent=5 // pred_region
        // Predicated region
        $region21: #{tpu_custom_call.1} parent=19 // pred_check
          %p126 = pneg %p30
        $region22: #{tpu_custom_call.1} parent=19 // pred_check_branch
          %128 = sbr.rel (%p126) target = $region24
        $region23: #{tpu_custom_call.1} parent=19 // pred_region
          %p129 = scmp.lt.s32.totalorder %s10, 1
          %s130 = scalar_select %p129, %s10, 1
          %s131 = smul.addr %s130, 8
          %s132 = scalar_lea.vmem %s0, %s131
        $region24: #{tpu_custom_call.1} parent=19 // pred_fallthru
          _
        // Predicated region
        $region25: #{tpu_custom_call.1} parent=19 // pred_check
          %p133 = pneg %p56
        $region26: #{tpu_custom_call.1} parent=19 // pred_check_branch
          %135 = sbr.rel (%p133) target = $region28
        $region27: #{tpu_custom_call.1} parent=19 // pred_region
          %p136 = scmp.lt.s32.totalorder %s10, 1
          %s137 = scalar_select %p136, %s10, 1
          %s138 = smul.addr %s137, 8
          %s139 = scalar_lea.vmem %s1, %s138
        $region28: #{tpu_custom_call.1} parent=19 // pred_fallthru
          _
      $region20: #{tpu_custom_call.1} parent=5 // pred_fallthru
        _
      %p140 = scmp.le.s32.totalorder 1, %s10
      %p141 = scmp.lt.s32.totalorder %s10, 3
      %p142 = pnand %p140, %p141
      %p143 = pneg %p142
      // Predicated region
      $region29: #{tpu_custom_call.1} parent=5 // pred_check
        _
      $region30: #{tpu_custom_call.1} parent=5 // pred_check_branch
        %145 = sbr.rel (%p142) target = $region32
      $region31: #{tpu_custom_call.1} parent=5 // pred_region
        %s146 = ssub.s32 %s10, 1
        %p147 = scmp.lt.s32.totalorder %s15, 1
        %s148 = scalar_select %p147, %s15, 1
        %s149 = smul.addr %s148, 8
        %s150 = scalar_lea.vmem %s0, %s149
        %p151 = pneg %p36
        %p152 = pneg %p33
        %p153 = scmp.lt.s32.totalorder %s15, 1
        %s154 = scalar_select %p153, %s15, 1
        %s155 = smul.addr %s154, 8
        %s156 = scalar_lea.vmem %s1, %s155
        %p157 = pneg %p62
        %p158 = pneg %p59
        %p159 = pneg %p83
        %p160 = pneg %p80
        %p161 = pneg %p104
        %p162 = pneg %p101
        %p163 = scmp.lt.s32.totalorder %s15, 1
        %s164 = scalar_select %p163, %s15, 1
        %s165 = smul.addr %s164, 8
        %s166 = scalar_lea.vmem %s0, %s165
        %p167 = scmp.lt.s32.totalorder %s15, 1
        %s168 = scalar_select %p167, %s15, 1
        %s169 = smul.addr %s168, 8
        %s170 = scalar_lea.vmem %s1, %s169
        %p171 = scmp.eq.s32.totalorder %s15, 0
        // Predicated region
        $region33: #{tpu_custom_call.1} parent=31 // pred_check
          %p172 = pneg %p171
        $region34: #{tpu_custom_call.1} parent=31 // pred_check_branch
          %174 = sbr.rel (%p172) target = $region36
        $region35: #{tpu_custom_call.1} parent=31 // pred_region
          %vm175 = vcmask 130048
          %176 = vst.msk [vmem:[#allocation2] sm:$0xff] %vm175, 0.0
        $region36: #{tpu_custom_call.1} parent=31 // pred_fallthru
          _
        %v177 = vld [vmem:[%s166] sm:$0xff]
        %v178 = vld [vmem:[%s170] sm:$0xff]
        %v179 = vld [vmem:[%s2] sm:$0x1]
        %vm180 = vcmask 130048
        %v181 = vsel %vm180, %v177, -inf
        %182 = vmax.xlane.f32.xlu0 %v181
        %v183 = vpop.xlane.xlu0 %182
        %v184 = vsub.f32 %v177, %v183
        %v185 = vmul.f32 %v184, 1.442695
        %v186 = vpow.pop %v185
        %v187 = vsel %vm180, %v186, 0.0
        %188 = vadd.xlane.f32.xlu0 %v187
        %v189 = vpop.xlane.xlu0 %188
        %v190 = vlog2.pop %v189
        %v191 = vmul.f32 %v190, 0.6931472
        %v192 = vadd.f32 %v183, %v191
        %v193 = vsub.f32 %v192, %v177
        %v194 = vlaneseq
        %v195 = vand.u32 %v194, 127
        %196 = vset.pattern.permute.xlu0 0
        %197 = vperm.xlu0 %196, %v178
        %v198 = vpop.permute.xlu0 %197
        %vm199 = vcmp.eq.s32.totalorder %v195, %v198
        %v201 = vlaneseq
        %v202 = vshrl.u32 %v201, 7
        %v203 = vsub.s32 0, %v202
        %v204 = vrot.slane %v179, %v203
        %v206 = vmul.f32 %v204, %v193
        %v207 = vsel %vm199, %v206, 0.0
        %v208 = vld [vmem:[#allocation2] sm:$0xff]
        %v209 = vadd.f32 %v208, %v207
        %210 = vst.msk [vmem:[#allocation2] sm:$0xff] %vm180, %v209
        %p211 = scmp.eq.s32.totalorder %s15, 1
        // Predicated region
        $region37: #{tpu_custom_call.1} parent=31 // pred_check
          %p212 = pneg %p211
        $region38: #{tpu_custom_call.1} parent=31 // pred_check_branch
          %214 = sbr.rel (%p212) target = $region40
        $region39: #{tpu_custom_call.1} parent=31 // pred_region
          %v215 = vld [vmem:[#allocation2] sm:$0xff]
          %v216 = vsel %vm180, %v215, 0.0
          %217 = vadd.xlane.f32.xlu0 %v216
          %v218 = vpop.xlane.xlu0 %217
          %v219 = vrot.slane %v218, 4
          %v220 = vadd.f32 %v218, %v219
          %v221 = vrot.slane %v220, 2
          %v222 = vadd.f32 %v220, %v221
          %v223 = vrot.slane %v222, 1
          %v224 = vadd.f32 %v222, %v223
          %s225 = vtos %v224
          %s226 = smul.f32 %s225, 0.0038876487
          %s227 = scalar_lea.smem [#allocation3], 0
          %228 = sst [smem:[%s227]] %s226
        $region40: #{tpu_custom_call.1} parent=31 // pred_fallthru
          _
        // Predicated region
        $region41: #{tpu_custom_call.1} parent=31 // pred_check
          %p229 = pneg %p101
        $region42: #{tpu_custom_call.1} parent=31 // pred_check_branch
          %231 = sbr.rel (%p229) target = $region44
        $region43: #{tpu_custom_call.1} parent=31 // pred_region
          %s233 = ssub.s32 16, 16
          %234 = vsyncadd [#allocation4], %s233
          %237 = dma.smem_to_hbm [#allocation3], 16, %s3, [#allocation4]
        $region44: #{tpu_custom_call.1} parent=31 // pred_fallthru
          _
        // Predicated region
        $region45: #{tpu_custom_call.1} parent=31 // pred_check
          %p238 = pneg %p101
        $region46: #{tpu_custom_call.1} parent=31 // pred_check_branch
          %240 = sbr.rel (%p238) target = $region48
        $region47: #{tpu_custom_call.1} parent=31 // pred_region
          %241 = dma.done [#allocation4], 16
        $region48: #{tpu_custom_call.1} parent=31 // pred_fallthru
          _
        %242 = sfence
      $region32: #{tpu_custom_call.1} parent=5 // pred_fallthru
        _
      %p243 = scmp.le.s32.totalorder 2, %s10
      // Predicated region
      $region49: #{tpu_custom_call.1} parent=5 // pred_check
        %p244 = pneg %p243
      $region50: #{tpu_custom_call.1} parent=5 // pred_check_branch
        %246 = sbr.rel (%p244) target = $region52
      $region51: #{tpu_custom_call.1} parent=5 // pred_region
        %s247 = ssub.s32 %s10, 2
      $region52: #{tpu_custom_call.1} parent=5 // pred_fallthru
        _
    $region6: #{tpu_custom_call.1} parent=1 // loop_footer
      %s14 = sadd.s32 1, %s10
    $region7: #{tpu_custom_call.1} parent=1 // loop_footer_branch
      %9 = sbr.rel target = $region3
    $region8: #{tpu_custom_call.1} parent=1 // loop_exit
      _
    %248 = vsyncpa [#allocation4], 1
    %s249 = scalar_lea.sflag [#allocation4], 1
    %250 = vsyncpa %s249, 1

</llo_original>
